<compile_context>
chip_gen: v7x
topology: tpu7x:2x2x1
jax: 0.10.0
libtpu: 0.0.40
codegen_flags: <defaults>
</compile_context>

<pallas_src>
import functools

import jax
import jax.numpy as jnp
from jax.experimental import pallas as pl
from jax.experimental.pallas import tpu as pltpu

# ----------------------------------------------------------------------------
# "text" -> vocab (mirrors the PyTorch script's global setup, done in-script)
# ----------------------------------------------------------------------------
text = "hello world! this is a tiny deterministic bigram corpus."
chars = sorted(list(set(text)))
vocab_size = len(chars)

_LANE = 128      # f32 lane width  (last dim)
_SUBLANE = 8     # f32 sublane width (second-to-last dim)


def _round_up(x, m):
    return ((x + m - 1) // m) * m


# ----------------------------------------------------------------------------
# Kernels
# ----------------------------------------------------------------------------
def _bigram_logits_kernel(idx_ref, table_ref, logits_ref):
    """Embedding lookup only (targets=None path)."""
    idx = idx_ref[...]                        # (TILE_N, 1) int32
    table = table_ref[...]                    # (V_pad, V_pad) f32, resident
    tn = idx.shape[0]
    v_pad = table.shape[1]

    col = jax.lax.broadcasted_iota(jnp.int32, (tn, v_pad), 1)
    onehot = (col == idx).astype(jnp.float32)                      # (TILE_N, V_pad)
    logits_ref[...] = jnp.dot(onehot, table,
                              preferred_element_type=jnp.float32)  # lane-dense store


def _lookup_and_tile_loss(ids, table, *, valid_v, n_valid):
    """Shared body: one-hot lookup + per-tile CE partial sum.

    table has the per-row logsumexp precomputed in column `valid_v`, so
    lse - picked is a single lane-reduce over (logits * sel)."""
    idx = ids[:, 0:1]                         # (TILE_N, 1) int32
    tgt = ids[:, 1:2]                         # (TILE_N, 1) int32
    tn = ids.shape[0]
    v_pad = table.shape[1]

    col = jax.lax.broadcasted_iota(jnp.int32, (tn, v_pad), 1)

    # Embedding lookup == one_hot(idx) @ table on the MXU (128-lane dense).
    onehot = (col == idx).astype(jnp.float32)
    logits = jnp.dot(onehot, table, preferred_element_type=jnp.float32)

    # lse - picked == logits[:, V] - logits[:, tgt], via one lane reduce.
    sel = (col == valid_v).astype(jnp.float32) - (col == tgt).astype(jnp.float32)
    per_row = jnp.sum(logits * sel, axis=-1, keepdims=True)        # (TILE_N, 1)

    # Row-validity mask is a pure function of the grid index + static N.
    row = pl.program_id(0) * tn + jax.lax.broadcasted_iota(jnp.int32, (tn, 1), 0)
    per_row = jnp.where(row < n_valid, per_row, jnp.float32(0.0))
    return logits, jnp.sum(per_row)


def _bigram_loss_logits_kernel(ids_ref, table_ref, logits_ref, loss_ref, *,
                               valid_v, n_valid):
    """Lookup + logits writeback + per-tile CE partial sum."""
    logits, tile_sum = _lookup_and_tile_loss(
        ids_ref[...], table_ref[...], valid_v=valid_v, n_valid=n_valid)
    logits_ref[...] = logits
    loss_ref[...] = jnp.broadcast_to(tile_sum, loss_ref.shape)      # (1, 1, 128)


def _bigram_loss_only_kernel(ids_ref, table_ref, loss_ref, *, valid_v, n_valid):
    """Loss-only variant: skips the dominant logits HBM writeback."""
    _, tile_sum = _lookup_and_tile_loss(
        ids_ref[...], table_ref[...], valid_v=valid_v, n_valid=n_valid)
    loss_ref[...] = jnp.broadcast_to(tile_sum, loss_ref.shape)


# ----------------------------------------------------------------------------
# Wrapper (PyTorch BigramLanguageModel.forward equivalent)
# ----------------------------------------------------------------------------
def bigram_forward(idx, table, targets=None, *, tile_n=4096, need_logits=True):
    """Pallas-backed equivalent of BigramLanguageModel.forward.

    idx:     (B, T) int tokens
    table:   (V, V) float32 embedding table
    targets: optional (B, T) int tokens
    Returns (logits, loss):
      - targets is None:                 logits (B, T, V), loss None
      - targets given, need_logits=True: logits (B*T, V),  loss scalar f32
      - targets given, need_logits=False: (None, loss)  -- skips the logits
        writeback entirely (fast training-loss path, not a PyTorch return mode)
    """
    B, T = idx.shape
    V = table.shape[0]
    N = B * T

    # Lane-dense vocab; +1 lane reserved for the precomputed per-row LSE column.
    v_pad = _round_up(V + 1, _LANE)

    # Sublane-aligned row tile; keep >= 2 grid steps when there is enough work
    # so the "parallel" N axis shards across both v7x TensorCores.
    n_rows = _round_up(N, _SUBLANE)
    tile_n = _round_up(min(tile_n, n_rows), _SUBLANE)
    if n_rows // tile_n < 2 and n_rows >= 2 * _SUBLANE:
        tile_n = _round_up((n_rows + 1) // 2, _SUBLANE)
    n_pad = _round_up(n_rows, tile_n)
    grid = (n_pad // tile_n,)

    table_f32 = table.astype(jnp.float32)
    table_p = jnp.zeros((v_pad, v_pad), jnp.float32).at[:V, :V].set(table_f32)

    idx_flat = idx.reshape(N).astype(jnp.int32)

    table_spec = pl.BlockSpec((v_pad, v_pad), lambda i: (0, 0))   # resident
    logits_spec = pl.BlockSpec((tile_n, v_pad), lambda i: (i, 0))
    cparams = pltpu.CompilerParams(
        dimension_semantics=("parallel",),
        vmem_limit_bytes=32 * 1024 * 1024,
    )

    if targets is None:
        # Logits-only variant: no target DMA, no CE compute on the inference path.
        idx_p = jnp.zeros((n_pad, 1), jnp.int32).at[:N, 0].set(idx_flat)
        logits_p = pl.pallas_call(
            _bigram_logits_kernel,
            out_shape=jax.ShapeDtypeStruct((n_pad, v_pad), jnp.float32),
            grid=grid,
            in_specs=[pl.BlockSpec((tile_n, 1), lambda i: (i, 0)), table_spec],
            out_specs=logits_spec,
            compiler_params=cparams,
        )(idx_p, table_p)
        return logits_p[:N, :V].reshape(B, T, V), None

    # Precompute per-vocab-row logsumexp once (V values) and park it in column V
    # of the padded table: the same one-hot matmul then delivers lse per row.
    table_p = table_p.at[:V, V].set(jax.nn.logsumexp(table_f32, axis=-1))

    # Pack idx + targets into one (n_pad, 2) int32 stream (halves the tiny
    # lane-padded per-step input DMAs vs. separate (tile_n, 1) blocks).
    tgt_flat = targets.reshape(N).astype(jnp.int32)
    ids = jnp.stack([idx_flat, tgt_flat], axis=-1)                 # (N, 2)
    ids_p = jnp.zeros((n_pad, 2), jnp.int32).at[:N].set(ids)

    ids_spec = pl.BlockSpec((tile_n, 2), lambda i: (i, 0))
    loss_spec = pl.BlockSpec((1, 1, _LANE), lambda i: (i, 0, 0))
    loss_shape = jax.ShapeDtypeStruct((grid[0], 1, _LANE), jnp.float32)

    if not need_logits:
        loss_parts = pl.pallas_call(
            functools.partial(_bigram_loss_only_kernel, valid_v=V, n_valid=N),
            out_shape=loss_shape,
            grid=grid,
            in_specs=[ids_spec, table_spec],
            out_specs=loss_spec,
            compiler_params=cparams,
        )(ids_p, table_p)
        loss = jnp.sum(loss_parts[:, 0, 0]) / jnp.float32(N)
        return None, loss

    logits_p, loss_parts = pl.pallas_call(
        functools.partial(_bigram_loss_logits_kernel, valid_v=V, n_valid=N),
        out_shape=(
            jax.ShapeDtypeStruct((n_pad, v_pad), jnp.float32),
            loss_shape,
        ),
        grid=grid,
        in_specs=[ids_spec, table_spec],
        out_specs=(logits_spec, loss_spec),
        compiler_params=cparams,
    )(ids_p, table_p)

    # Per-tile partial sums -> mean over the true (unpadded) N rows.
    loss = jnp.sum(loss_parts[:, 0, 0]) / jnp.float32(N)
    return logits_p[:N, :V], loss


# ----------------------------------------------------------------------------
# Pure-JAX reference (for a silent correctness check)
# ----------------------------------------------------------------------------
def _reference(idx, table, targets):
    logits = table[idx]                             # (B, T, V)
    B, T, V = logits.shape
    lf = logits.reshape(B * T, V)
    tf = targets.reshape(B * T)
    lse = jax.nn.logsumexp(lf, axis=-1)
    picked = jnp.take_along_axis(lf, tf[:, None], axis=-1)[:, 0]
    return lf, jnp.mean(lse - picked)


if __name__ == "__main__":
    key = jax.random.PRNGKey(0)
    k_tab, k_idx, k_tgt = jax.random.split(key, 3)

    B, T = 2, 8
    V = vocab_size

    # nn.Embedding default init: N(0, 1)
    table = jax.random.normal(k_tab, (V, V), dtype=jnp.float32)
    idx = jax.random.randint(k_idx, (B, T), 0, V, dtype=jnp.int32)
    targets = jax.random.randint(k_tgt, (B, T), 0, V, dtype=jnp.int32)

    ref_logits, ref_loss = _reference(idx, table, targets)

    # Full path: logits + loss (PyTorch forward with targets)
    logits, loss = bigram_forward(idx, table, targets)
    logits = jax.block_until_ready(logits)
    loss = jax.block_until_ready(loss)
    assert logits.shape == (B * T, V)
    assert jnp.allclose(logits, ref_logits, atol=1e-5)
    assert jnp.allclose(loss, ref_loss, atol=1e-5)

    # Loss-only fast path (skips the dominant logits HBM writeback)
    none_logits, loss_only = bigram_forward(idx, table, targets, need_logits=False)
    loss_only = jax.block_until_ready(loss_only)
    assert none_logits is None
    assert jnp.allclose(loss_only, ref_loss, atol=1e-5)

    # targets=None path (logits only), as in PyTorch
    logits_only, none_loss = bigram_forward(idx, table, None)
    logits_only = jax.block_until_ready(logits_only)
    assert logits_only.shape == (B, T, V) and none_loss is None
    assert jnp.allclose(logits_only, table[idx], atol=1e-5)

    print("KERNEL_OK")
</pallas_src>

<mosaic_0001>
module attributes {stable_mosaic.version = 11 : i64} {
  func.func @_bigram_loss_logits_kernel(%arg0: i32, %arg1: memref<8x2xi32, #tpu.memory_space<vmem>>, %arg2: memref<128x128xf32, #tpu.memory_space<vmem>>, %arg3: memref<8x128xf32, #tpu.memory_space<vmem>>, %arg4: memref<1x1x128xf32, #tpu.memory_space<vmem>>) attributes {dimension_semantics = [#tpu.dimension_semantics<parallel>], iteration_bounds = array<i64: 2>, scalar_prefetch = 0 : i64, scratch_operands = 0 : i64, tpu.core_type = #tpu.core_type<tc>, window_params = [{transform_indices = @transform_0, window_bounds = array<i64: 8, 2>}, {pipeline_mode = #tpu.pipeline_mode<synchronous>, transform_indices = @transform_1, window_bounds = array<i64: 128, 128>}, {transform_indices = @transform_2, window_bounds = array<i64: 8, 128>}, {transform_indices = @transform_3, window_bounds = array<i64: 1, 1, 128>}]} {
    %c0 = arith.constant 0 : index
    %c0_0 = arith.constant 0 : index
    %0 = vector.load %arg1[%c0, %c0_0] : memref<8x2xi32, #tpu.memory_space<vmem>>, vector<8x2xi32>
    %c0_1 = arith.constant 0 : index
    %c0_2 = arith.constant 0 : index
    %1 = vector.load %arg2[%c0_1, %c0_2] : memref<128x128xf32, #tpu.memory_space<vmem>>, vector<128x128xf32>
    %2 = vector.extract_strided_slice %0 {offsets = [0, 0], sizes = [8, 1], strides = [1, 1]} : vector<8x2xi32> to vector<8x1xi32>
    %3 = vector.extract_strided_slice %0 {offsets = [0, 1], sizes = [8, 1], strides = [1, 1]} : vector<8x2xi32> to vector<8x1xi32>
    %4 = tpu.iota {dimensions = array<i32: 1>} : vector<8x128xi32>
    %5 = vector.broadcast %2 : vector<8x1xi32> to vector<8x128xi32>
    %6 = arith.cmpi eq, %4, %5 : vector<8x128xi32>
    %7 = arith.extui %6 : vector<8x128xi1> to vector<8x128xi32>
    %8 = arith.sitofp %7 : vector<8x128xi32> to vector<8x128xf32>
    %cst = arith.constant dense<0.000000e+00> : vector<8x128xf32>
    %9 = tpu.matmul %8, %1, %cst {dimension_numbers = #tpu.dot_dimension_numbers<[1], [0], [0], [1], [0, 0, 1, 1], [], []>} : vector<8x128xf32>, vector<128x128xf32>, vector<8x128xf32> -> vector<8x128xf32>
    %c22_i32 = arith.constant 22 : i32
    %10 = vector.broadcast %c22_i32 : i32 to vector<8x128xi32>
    %11 = arith.cmpi eq, %4, %10 : vector<8x128xi32>
    %12 = arith.extui %11 : vector<8x128xi1> to vector<8x128xi32>
    %13 = arith.sitofp %12 : vector<8x128xi32> to vector<8x128xf32>
    %14 = vector.broadcast %3 : vector<8x1xi32> to vector<8x128xi32>
    %15 = arith.cmpi eq, %4, %14 : vector<8x128xi32>
    %16 = arith.extui %15 : vector<8x128xi1> to vector<8x128xi32>
    %17 = arith.sitofp %16 : vector<8x128xi32> to vector<8x128xf32>
    %18 = arith.subf %13, %17 : vector<8x128xf32>
    %19 = arith.mulf %9, %18 : vector<8x128xf32>
    %cst_3 = arith.constant dense<0.000000e+00> : vector<8xf32>
    %20 = vector.multi_reduction <add>, %19, %cst_3 [1] : vector<8x128xf32> to vector<8xf32>
    %21 = vector.shape_cast %20 : vector<8xf32> to vector<8x1xf32>
    %c8_i32 = arith.constant 8 : i32
    %22 = arith.muli %arg0, %c8_i32 : i32
    %23 = tpu.iota {dimensions = array<i32: 0>} : vector<8x1xi32>
    %24 = vector.broadcast %22 : i32 to vector<8x1xi32>
    %25 = arith.addi %24, %23 : vector<8x1xi32>
    %c16_i32 = arith.constant 16 : i32
    %26 = vector.broadcast %c16_i32 : i32 to vector<8x1xi32>
    %27 = arith.cmpi slt, %25, %26 : vector<8x1xi32>
    %cst_4 = arith.constant 0.000000e+00 : f32
    %28 = vector.broadcast %cst_4 : f32 to vector<8x1xf32>
    %29 = arith.select %27, %21, %28 : vector<8x1xi1>, vector<8x1xf32>
    %30 = vector.shape_cast %29 : vector<8x1xf32> to vector<1x8x1xf32>
    %cst_5 = arith.constant dense<0.000000e+00> : vector<1xf32>
    %31 = vector.multi_reduction <add>, %30, %cst_5 [1, 2] : vector<1x8x1xf32> to vector<1xf32>
    %32 = vector.shape_cast %31 : vector<1xf32> to vector<1x1x1xf32>
    %33 = vector.extract %32[0, 0, 0] : f32 from vector<1x1x1xf32>
    %c0_6 = arith.constant 0 : index
    %c0_7 = arith.constant 0 : index
    %34 = vector.load %arg3[%c0_6, %c0_7] : memref<8x128xf32, #tpu.memory_space<vmem>>, vector<8x128xf32>
    tpu.vector_store %arg3[%c0_6, %c0_7], %9 {strides = array<i32>} : memref<8x128xf32, #tpu.memory_space<vmem>>, vector<8x128xf32>,
    %35 = vector.broadcast %33 : f32 to vector<1x1x128xf32>
    %c0_8 = arith.constant 0 : index
    %c0_9 = arith.constant 0 : index
    %c0_10 = arith.constant 0 : index
    %36 = vector.load %arg4[%c0_8, %c0_9, %c0_10] : memref<1x1x128xf32, #tpu.memory_space<vmem>>, vector<1x1x128xf32>
    tpu.vector_store %arg4[%c0_8, %c0_9, %c0_10], %35 {strides = array<i32>} : memref<1x1x128xf32, #tpu.memory_space<vmem>>, vector<1x1x128xf32>,
    return
  }
  func.func @transform_0(%arg0: i32) -> (i32, i32) {
    %c0_i32 = arith.constant 0 : i32
    %c0_i32_0 = arith.constant 0 : i32
    return %arg0, %c0_i32 : i32, i32
  }
  func.func @transform_1(%arg0: i32) -> (i32, i32) {
    %c0_i32 = arith.constant 0 : i32
    %c0_i32_0 = arith.constant 0 : i32
    %c0_i32_1 = arith.constant 0 : i32
    return %c0_i32, %c0_i32_0 : i32, i32
  }
  func.func @transform_2(%arg0: i32) -> (i32, i32) {
    %c0_i32 = arith.constant 0 : i32
    %c0_i32_0 = arith.constant 0 : i32
    return %arg0, %c0_i32 : i32, i32
  }
  func.func @transform_3(%arg0: i32) -> (i32, i32, i32) {
    %c0_i32 = arith.constant 0 : i32
    %c0_i32_0 = arith.constant 0 : i32
    %c0_i32_1 = arith.constant 0 : i32
    return %arg0, %c0_i32, %c0_i32_0 : i32, i32, i32
  }
}

</mosaic_0001>

<llo_original>
// kernel: tpu_custom_call.1
$region0: #{tpu_custom_call.1}
  #allocation0 [shape = 'u32[]', space=smem, size = 0x4, offset = 0x4, fixed_abs, tag = 'smem constant byte address 0x4 - core index']
  #allocation1 [shape = 'u32[144,128]{1,0:T(1,128)}', space=vmem, size = 0x12000, scoped, tag = 'internal scratch']
  %s0 = inlined_call_operand.vmem [shape: s32[16,2], index: 0, kind: input, shape index: {}]
  %s1 = inlined_call_operand.hbm [shape: f32[128,128], index: 1, kind: input, shape index: {}]
  %s2 = inlined_call_operand.hbm [shape: f32[16,128], index: 2, kind: output, shape index: {0}]
  %s3 = inlined_call_operand.hbm [shape: f32[2,1,128], index: 3, kind: output, shape index: {1}]
  %4 = xla_tuple %s2, %s3
  %s5 = sld [smem:[#allocation0]]
  $region53: #{tpu_custom_call.1} parent=0
    _
  %s7 = ssub.s32 1, %s5
  %s8 = scalar_select 0, %s7, %s5
  $region1: #{tpu_custom_call.1} parent=0
    #allocation2 [shape = 'u8[65536]{0}', space=vmem, size = 0x10000, scoped, tag = 'input window, operand 1, single buffered']
    #allocation3 [shape = 's32[2]{0}', space=sflag, size = 0x8, scoped, tag = 'scoped memory for tpu_custom_call.1']
    #allocation4 [shape = 's32[2]{0}', space=sflag, size = 0x8, scoped, tag = 'scoped memory for tpu_custom_call.1']
    #allocation5 [shape = 'u8[8192]{0}', space=vmem, size = 0x2000, scoped, tag = 'output window, operand 0']
    #allocation6 [shape = 'u8[1024]{0}', space=vmem, size = 0x400, scoped, tag = 'output window, operand 1']
    #allocation7 [shape = 's32[2]{0}', space=sflag, size = 0x8, scoped, tag = 'scoped memory for tpu_custom_call.1']
    %9 = vsyncpa [#allocation3], 0
    %10 = vsyncpa [#allocation4], 0
    %s11 = scalar_lea.sflag [#allocation4], 1
    %12 = vsyncpa %s11, 0
    %13 = vsyncpa [#allocation7], 0
    %s14 = scalar_lea.sflag [#allocation7], 1
    %15 = vsyncpa %s14, 0
    loop: start=0, step=1, limit=4
    $region2: #{tpu_custom_call.1} parent=1 // loop_pre_header
      _
    $region3: #{tpu_custom_call.1} parent=1 // loop_header
      %s17 = sphi 0, %s21
      %p18 = scmp.ge.s32.totalorder %s17, 4
      %s27 = sphi 0, %s29
      %s30 = sphi 0, %s27
      %s31 = sphi 0, %s30
      %s47 = sphi 0, %s31
      %s51 = sphi 0, %s51
      %s53 = sphi 0, %s51
      %s54 = sphi 0, %s53
      %s68 = sphi 0, %s54
      %s74 = sphi 0, %s76
      %s77 = sphi 0, %s74
      %s78 = sphi 0, %s77
      %s94 = sphi 0, %s78
      %s100 = sphi 0, %s102
      %s103 = sphi 0, %s100
      %s104 = sphi 0, %s103
      %s120 = sphi 0, %s104
    $region4: #{tpu_custom_call.1} parent=1 // loop_header_branch
      %20 = sbr.rel (%p18) target = $region8
    $region5: #{tpu_custom_call.1} parent=1 // loop_body
      %s22 = ssub.s32 %s17, 1
      %s23 = ssub.s32 %s17, 2
      %s24 = sadd.s32 %s17, 1
      %s25 = ssub.s32 %s17, %s24
      %p26 = scmp.eq.s32.totalorder %s25, 0
      %s28 = sadd.s32 %s27, 1
      %s29 = scalar_select %p26, %s27, %s28
      %p32 = pneg %p26
      %p33 = scmp.eq.s32.totalorder %s17, 1
      %p34 = por %p32, %p33
      %p35 = scmp.ne.s32.totalorder %s27, %s30
      %p36 = scmp.eq.s32.totalorder %s17, 0
      %p37 = por %p35, %p36
      %p38 = scmp.ne.s32.totalorder %s27, %s30
      %p39 = scmp.eq.s32.totalorder %s22, 1
      %p40 = por %p38, %p39
      %p41 = scmp.ne.s32.totalorder %s30, %s31
      %p42 = scmp.eq.s32.totalorder %s22, 0
      %p43 = por %p41, %p42
      %p44 = scmp.ne.s32.totalorder %s30, %s31
      %p45 = scmp.eq.s32.totalorder %s23, 1
      %p46 = por %p44, %p45
      %p48 = scmp.ne.s32.totalorder %s31, %s47
      %p49 = scmp.eq.s32.totalorder %s23, 0
      %p50 = por %p48, %p49
      %s52 = sadd.s32 %s51, 1
      %p55 = scmp.eq.s32.totalorder %s17, 1
      %p56 = scmp.ne.s32.totalorder %s51, %s53
      %p57 = scmp.eq.s32.totalorder %s17, 0
      %p58 = por %p56, %p57
      %p59 = scmp.ne.s32.totalorder %s51, %s53
      %p60 = scmp.eq.s32.totalorder %s22, 1
      %p61 = por %p59, %p60
      %p62 = scmp.ne.s32.totalorder %s53, %s54
      %p63 = scmp.eq.s32.totalorder %s22, 0
      %p64 = por %p62, %p63
      %p65 = scmp.ne.s32.totalorder %s53, %s54
      %p66 = scmp.eq.s32.totalorder %s23, 1
      %p67 = por %p65, %p66
      %p69 = scmp.ne.s32.totalorder %s54, %s68
      %p70 = scmp.eq.s32.totalorder %s23, 0
      %p71 = por %p69, %p70
      %s72 = ssub.s32 %s17, %s24
      %p73 = scmp.eq.s32.totalorder %s72, 0
      %s75 = sadd.s32 %s74, 1
      %s76 = scalar_select %p73, %s74, %s75
      %p79 = pneg %p73
      %p80 = scmp.eq.s32.totalorder %s17, 1
      %p81 = por %p79, %p80
      %p82 = scmp.ne.s32.totalorder %s74, %s77
      %p83 = scmp.eq.s32.totalorder %s17, 0
      %p84 = por %p82, %p83
      %p85 = scmp.ne.s32.totalorder %s74, %s77
      %p86 = scmp.eq.s32.totalorder %s22, 1
      %p87 = por %p85, %p86
      %p88 = scmp.ne.s32.totalorder %s77, %s78
      %p89 = scmp.eq.s32.totalorder %s22, 0
      %p90 = por %p88, %p89
      %p91 = scmp.ne.s32.totalorder %s77, %s78
      %p92 = scmp.eq.s32.totalorder %s23, 1
      %p93 = por %p91, %p92
      %p95 = scmp.ne.s32.totalorder %s78, %s94
      %p96 = scmp.eq.s32.totalorder %s23, 0
      %p97 = por %p95, %p96
      %s98 = ssub.s32 %s17, %s24
      %p99 = scmp.eq.s32.totalorder %s98, 0
      %s101 = sadd.s32 %s100, 1
      %s102 = scalar_select %p99, %s100, %s101
      %p105 = pneg %p99
      %p106 = scmp.eq.s32.totalorder %s17, 1
      %p107 = por %p105, %p106
      %p108 = scmp.ne.s32.totalorder %s100, %s103
      %p109 = scmp.eq.s32.totalorder %s17, 0
      %p110 = por %p108, %p109
      %p111 = scmp.ne.s32.totalorder %s100, %s103
      %p112 = scmp.eq.s32.totalorder %s22, 1
      %p113 = por %p111, %p112
      %p114 = scmp.ne.s32.totalorder %s103, %s104
      %p115 = scmp.eq.s32.totalorder %s22, 0
      %p116 = por %p114, %p115
      %p117 = scmp.ne.s32.totalorder %s103, %s104
      %p118 = scmp.eq.s32.totalorder %s23, 1
      %p119 = por %p117, %p118
      %p121 = scmp.ne.s32.totalorder %s104, %s120
      %p122 = scmp.eq.s32.totalorder %s23, 0
      %p123 = por %p121, %p122
      %p124 = scmp.le.s32.totalorder 1, %s17
      %p125 = scmp.lt.s32.totalorder %s17, 3
      %p126 = pnand %p124, %p125
      %p127 = pneg %p126
      // Predicated region
      $region9: #{tpu_custom_call.1} parent=5 // pred_check
        _
      $region10: #{tpu_custom_call.1} parent=5 // pred_check_branch
        %129 = sbr.rel (%p126) target = $region12
      $region11: #{tpu_custom_call.1} parent=5 // pred_region
        %s130 = ssub.s32 %s17, 1
        // Predicated region
        $region13: #{tpu_custom_call.1} parent=11 // pred_check
          %p131 = pneg %p64
        $region14: #{tpu_custom_call.1} parent=11 // pred_check_branch
          %133 = sbr.rel (%p131) target = $region16
        $region15: #{tpu_custom_call.1} parent=11 // pred_region
          %s135 = ssub.s32 2048, 2048
          %136 = vsyncadd [#allocation3], %s135
          %s137 = sshll.u32 [#allocation2], 4
          %s138 = int_to_ptr.vmem [resolvable:$true] %s137
          %143 = dma.hbm_to_vmem [thread:$0]  %s1, 2048, %s138, [#allocation3], 128, 128, 8
        $region16: #{tpu_custom_call.1} parent=11 // pred_fallthru
          _
      $region12: #{tpu_custom_call.1} parent=5 // pred_fallthru
        _
      %p144 = scmp.lt.s32.totalorder %s17, 2
      // Predicated region
      $region17: #{tpu_custom_call.1} parent=5 // pred_check
        %p145 = pneg %p144
      $region18: #{tpu_custom_call.1} parent=5 // pred_check_branch
        %147 = sbr.rel (%p145) target = $region20
      $region19: #{tpu_custom_call.1} parent=5 // pred_region
        // Predicated region
        $region21: #{tpu_custom_call.1} parent=19 // pred_check
          %p148 = pneg %p37
        $region22: #{tpu_custom_call.1} parent=19 // pred_check_branch
          %150 = sbr.rel (%p148) target = $region24
        $region23: #{tpu_custom_call.1} parent=19 // pred_region
          %p151 = scmp.lt.s32.totalorder %s17, 1
          %s152 = scalar_select %p151, %s17, 1
          %s153 = smul.addr %s152, 8
          %s154 = scalar_lea.vmem %s0, %s153
        $region24: #{tpu_custom_call.1} parent=19 // pred_fallthru
          _
      $region20: #{tpu_custom_call.1} parent=5 // pred_fallthru
        _
      %p155 = scmp.le.s32.totalorder 1, %s17
      %p156 = scmp.lt.s32.totalorder %s17, 3
      %p157 = pnand %p155, %p156
      %p158 = pneg %p157
      // Predicated region
      $region25: #{tpu_custom_call.1} parent=5 // pred_check
        _
      $region26: #{tpu_custom_call.1} parent=5 // pred_check_branch
        %160 = sbr.rel (%p157) target = $region28
      $region27: #{tpu_custom_call.1} parent=5 // pred_region
        %s161 = ssub.s32 %s17, 1
        // Predicated region
        $region29: #{tpu_custom_call.1} parent=27 // pred_check
          %p162 = pneg %p64
        $region30: #{tpu_custom_call.1} parent=27 // pred_check_branch
          %164 = sbr.rel (%p162) target = $region32
        $region31: #{tpu_custom_call.1} parent=27 // pred_region
          %165 = dma.done [#allocation3], 2048
        $region32: #{tpu_custom_call.1} parent=27 // pred_fallthru
          _
        %p166 = scmp.lt.s32.totalorder %s22, 1
        %s167 = scalar_select %p166, %s22, 1
        %s168 = smul.addr %s167, 8
        %s169 = scalar_lea.vmem %s0, %s168
        %p170 = pneg %p43
        %p171 = pneg %p40
        %p172 = pneg %p64
        %p173 = pneg %p61
        %p174 = pneg %p90
        %p175 = pneg %p87
        %s176 = sand.u32 %s77, 1
        %s177 = scalar_lea.sflag [#allocation4], %s176
        %s178 = sand.u32 %s77, 1
        %s179 = smul.addr %s178, 8
        %s180 = scalar_lea.vmem [#allocation5], %s179
        %p181 = pneg %p116
        %p182 = pneg %p113
        %s183 = sand.u32 %s103, 1
        %s184 = scalar_lea.sflag [#allocation7], %s183
        %s185 = sand.u32 %s103, 1
        %s186 = scalar_lea.vmem [#allocation6], %s185
        %p187 = scmp.lt.s32.totalorder %s22, 1
        %s188 = scalar_select %p187, %s22, 1
        %s189 = smul.addr %s188, 8
        %s190 = scalar_lea.vmem %s0, %s189
        %v191 = vld [vmem:[%s190] sm:$0xff]
        %v192 = vld [vmem:[#allocation2] sm:$0xff]
        %v193 = vld [vmem:[#allocation2 + $0x8] sm:$0xff]
        %v194 = vld [vmem:[#allocation2 + $0x10] sm:$0xff]
        %v195 = vld [vmem:[#allocation2 + $0x18] sm:$0xff]
        %v196 = vld [vmem:[#allocation2 + $0x20] sm:$0xff]
        %v197 = vld [vmem:[#allocation2 + $0x28] sm:$0xff]
        %v198 = vld [vmem:[#allocation2 + $0x30] sm:$0xff]
        %v199 = vld [vmem:[#allocation2 + $0x38] sm:$0xff]
        %v200 = vld [vmem:[#allocation2 + $0x40] sm:$0xff]
        %v201 = vld [vmem:[#allocation2 + $0x48] sm:$0xff]
        %v202 = vld [vmem:[#allocation2 + $0x50] sm:$0xff]
        %v203 = vld [vmem:[#allocation2 + $0x58] sm:$0xff]
        %v204 = vld [vmem:[#allocation2 + $0x60] sm:$0xff]
        %v205 = vld [vmem:[#allocation2 + $0x68] sm:$0xff]
        %v206 = vld [vmem:[#allocation2 + $0x70] sm:$0xff]
        %v207 = vld [vmem:[#allocation2 + $0x78] sm:$0xff]
        %v208 = vlaneseq
        %v209 = vand.u32 %v208, 127
        %210 = vset.pattern.permute.xlu0 0
        %211 = vperm.xlu0 %210, %v191
        %v212 = vpop.permute.xlu0 %211
        %vm213 = vcmp.eq.s32.totalorder %v209, %v212
        %v214 = vsel %vm213, 1, 0
        %v215 = vcvt.s32.f32 %v214
        %216 = vmatprep.subr.mxu0 0.0
        %217 = vmatpush1.msra.mxu0 %v192
        %218 = vmatprep.subr.mxu0 0.0
        %219 = vmatpush1.msra.mxu0 %v193
        %220 = vmatprep.subr.mxu0 0.0
        %221 = vmatpush1.msra.mxu0 %v194
        %222 = vmatprep.subr.mxu0 0.0
        %223 = vmatpush1.msra.mxu0 %v195
        %224 = vmatprep.subr.mxu0 0.0
        %225 = vmatpush1.msra.mxu0 %v196
        %226 = vmatprep.subr.mxu0 0.0
        %227 = vmatpush1.msra.mxu0 %v197
        %228 = vmatprep.subr.mxu0 0.0
        %229 = vmatpush1.msra.mxu0 %v198
        %230 = vmatprep.subr.mxu0 0.0
        %231 = vmatpush1.msra.mxu0 %v199
        %232 = vmatprep.subr.mxu0 0.0
        %233 = vmatpush1.msra.mxu0 %v200
        %234 = vmatprep.subr.mxu0 0.0
        %235 = vmatpush1.msra.mxu0 %v201
        %236 = vmatprep.subr.mxu0 0.0
        %237 = vmatpush1.msra.mxu0 %v202
        %238 = vmatprep.subr.mxu0 0.0
        %239 = vmatpush1.msra.mxu0 %v203
        %240 = vmatprep.subr.mxu0 0.0
        %241 = vmatpush1.msra.mxu0 %v204
        %242 = vmatprep.subr.mxu0 0.0
        %243 = vmatpush1.msra.mxu0 %v205
        %244 = vmatprep.subr.mxu0 0.0
        %245 = vmatpush1.msra.mxu0 %v206
        %246 = vmatprep.subr.mxu0 0.0
        %247 = vmatpush1.msra.mxu0 %v207
        %248 = vmatprep.subr.mxu0 0.0
        %249 = vmatpush1.msra.mxu0 0.0
        %250 = vmatprep.subr.mxu0 0.0
        %251 = vmatpush1.msra.mxu0 0.0
        %252 = vmatprep.subr.mxu0 0.0
        %253 = vmatpush1.msra.mxu0 0.0
        %254 = vmatprep.subr.mxu0 0.0
        %255 = vmatpush1.msra.mxu0 0.0
        %256 = vmatprep.subr.mxu0 0.0
        %257 = vmatpush1.msra.mxu0 0.0
        %258 = vmatprep.subr.mxu0 0.0
        %259 = vmatpush1.msra.mxu0 0.0
        %260 = vmatprep.subr.mxu0 0.0
        %261 = vmatpush1.msra.mxu0 0.0
        %262 = vmatprep.subr.mxu0 0.0
        %263 = vmatpush1.msra.mxu0 0.0
        %264 = vmatprep.subr.mxu0 0.0
        %265 = vmatpush1.msra.mxu0 0.0
        %266 = vmatprep.subr.mxu0 0.0
        %267 = vmatpush1.msra.mxu0 0.0
        %268 = vmatprep.subr.mxu0 0.0
        %269 = vmatpush1.msra.mxu0 0.0
        %270 = vmatprep.subr.mxu0 0.0
        %271 = vmatpush1.msra.mxu0 0.0
        %272 = vmatprep.subr.mxu0 0.0
        %273 = vmatpush1.msra.mxu0 0.0
        %274 = vmatprep.subr.mxu0 0.0
        %275 = vmatpush1.msra.mxu0 0.0
        %276 = vmatprep.subr.mxu0 0.0
        %277 = vmatpush1.msra.mxu0 0.0
        %278 = vmatprep.subr.mxu0 0.0
        %279 = vmatpush1.msra.mxu0 0.0
        %280 = vmatprep.mubr.f32.mxu0 0.0
        %281 = vmatmul.mubr.f32.gmra.mrb[0].mxu0 %v215
        %v282 = vpop.f32.mrb[0].mxu0
        %v283 = vadd.f32 0.0, %v282
        %v284 = vpop.f32.mrb[0].mxu0
        %285 = vdwg.mxu0
        %vm286 = vcmp.eq.s32.totalorder %v209, 22
        %v287 = vsel %vm286, 1, 0
        %v288 = vcvt.s32.f32 %v287
        %289 = vset.pattern.permute.xlu0 1
        %290 = vperm.xlu0 %289, %v191
        %v291 = vpop.permute.xlu0 %290
        %vm292 = vcmp.eq.s32.totalorder %v209, %v291
        %v293 = vsel %vm292, 1, 0
        %v294 = vcvt.s32.f32 %v293
        %v295 = vsub.f32 %v288, %v294
        %v296 = vmul.f32 %v283, %v295
        %297 = vadd.xlane.f32.xlu0 %v296
        %v298 = vpop.xlane.xlu0 %297
        %s299 = smul.u32 %s22, 8
        %v300 = vlaneseq
        %v301 = vshrl.u32 %v300, 7
        %v302 = vstv %s299
        %v303 = vadd.s32 %v302, %v301
        %vm304 = vcmp.lt.s32.totalorder %v303, 16
        %v305 = vsel %vm304, %v298, 0.0
        %vm306 = vcmask 7168
        %v307 = vsel %vm306, %v305, 0.0
        %308 = vadd.xlane.f32.xlu0 %v307
        %v309 = vpop.xlane.xlu0 %308
        %v310 = vrot.slane %v309, 4
        %v311 = vadd.f32 %v309, %v310
        %v312 = vrot.slane %v311, 2
        %v313 = vadd.f32 %v311, %v312
        %v314 = vrot.slane %v313, 1
        %v315 = vadd.f32 %v313, %v314
        %s316 = vtos %v315
        %317 = vst [vmem:[%s180] sm:$0xff] %v283
        %v318 = vstv %s316
        %319 = vst [vmem:[%s186] sm:$0x1] %v318
        %s320 = sand.u32 %s77, 1
        %s321 = scalar_lea.sflag [#allocation4], %s320
        %s322 = sand.u32 %s77, 1
        %s323 = smul.addr %s322, 8
        %s324 = scalar_lea.vmem [#allocation5], %s323
        %s325 = sand.u32 %s103, 1
        %s326 = scalar_lea.sflag [#allocation7], %s325
        %s327 = sand.u32 %s103, 1
        %s328 = scalar_lea.vmem [#allocation6], %s327
        // Predicated region
        $region33: #{tpu_custom_call.1} parent=27 // pred_check
          %p329 = pneg %p87
        $region34: #{tpu_custom_call.1} parent=27 // pred_check_branch
          %331 = sbr.rel (%p329) target = $region36
        $region35: #{tpu_custom_call.1} parent=27 // pred_region
          %s333 = ssub.s32 128, 128
          %334 = vsyncadd %s321, %s333
          %s335 = smul.addr %s22, 128
          %s336 = scalar_lea.hbm %s2, %s335
          %s338 = sshll.u32 %s324, 4
          %s339 = int_to_ptr.vmem [resolvable:$true] %s338
          %341 = dma.vmem_to_hbm [thread:$0]  %s339, 128, %s336, %s321
        $region36: #{tpu_custom_call.1} parent=27 // pred_fallthru
          _
        // Predicated region
        $region37: #{tpu_custom_call.1} parent=27 // pred_check
          %p342 = pneg %p113
        $region38: #{tpu_custom_call.1} parent=27 // pred_check_branch
          %344 = sbr.rel (%p342) target = $region40
        $region39: #{tpu_custom_call.1} parent=27 // pred_region
          %s346 = ssub.s32 16, 16
          %347 = vsyncadd %s326, %s346
          %s348 = smul.addr %s22, 16
          %s349 = scalar_lea.hbm %s3, %s348
          %s351 = sshll.u32 %s328, 4
          %s352 = int_to_ptr.vmem [resolvable:$true] %s351
          %354 = dma.vmem_to_hbm [thread:$0]  %s352, 16, %s349, %s326
        $region40: #{tpu_custom_call.1} parent=27 // pred_fallthru
          _
      $region28: #{tpu_custom_call.1} parent=5 // pred_fallthru
        _
      %p355 = scmp.le.s32.totalorder 2, %s17
      // Predicated region
      $region41: #{tpu_custom_call.1} parent=5 // pred_check
        %p356 = pneg %p355
      $region42: #{tpu_custom_call.1} parent=5 // pred_check_branch
        %358 = sbr.rel (%p356) target = $region44
      $region43: #{tpu_custom_call.1} parent=5 // pred_region
        %s359 = ssub.s32 %s17, 2
        // Predicated region
        $region45: #{tpu_custom_call.1} parent=43 // pred_check
          %p360 = pneg %p93
        $region46: #{tpu_custom_call.1} parent=43 // pred_check_branch
          %362 = sbr.rel (%p360) target = $region48
        $region47: #{tpu_custom_call.1} parent=43 // pred_region
          %s363 = sand.u32 %s78, 1
          %s364 = scalar_lea.sflag [#allocation4], %s363
          %s365 = sand.u32 %s78, 1
          %s366 = smul.addr %s365, 8
          %s367 = scalar_lea.vmem [#allocation5], %s366
          %368 = dma.done %s364, 128
        $region48: #{tpu_custom_call.1} parent=43 // pred_fallthru
          _
        // Predicated region
        $region49: #{tpu_custom_call.1} parent=43 // pred_check
          %p369 = pneg %p119
        $region50: #{tpu_custom_call.1} parent=43 // pred_check_branch
          %371 = sbr.rel (%p369) target = $region52
        $region51: #{tpu_custom_call.1} parent=43 // pred_region
          %s372 = sand.u32 %s104, 1
          %s373 = scalar_lea.sflag [#allocation7], %s372
          %s374 = sand.u32 %s104, 1
          %s375 = scalar_lea.vmem [#allocation6], %s374
          %376 = dma.done %s373, 16
        $region52: #{tpu_custom_call.1} parent=43 // pred_fallthru
          _
      $region44: #{tpu_custom_call.1} parent=5 // pred_fallthru
        _
    $region6: #{tpu_custom_call.1} parent=1 // loop_footer
      %s21 = sadd.s32 1, %s17
    $region7: #{tpu_custom_call.1} parent=1 // loop_footer_branch
      %16 = sbr.rel target = $region3
    $region8: #{tpu_custom_call.1} parent=1 // loop_exit
      _
    %377 = vsyncpa [#allocation3], 1
    %s378 = scalar_lea.sflag [#allocation3], 1
    %379 = vsyncpa %s378, 1
    %380 = vsyncpa [#allocation4], 1
    %s381 = scalar_lea.sflag [#allocation4], 1
    %382 = vsyncpa %s381, 1
    %383 = vsyncpa [#allocation7], 1
    %s384 = scalar_lea.sflag [#allocation7], 1
    %385 = vsyncpa %s384, 1

</llo_original>
